<compile_context>
chip_gen: v5e
topology: v5e:2x2
jax: 0.10.0
libtpu: 0.0.40
codegen_flags: <defaults>
</compile_context>

<pallas_src>
import functools
import math

import jax
import jax.numpy as jnp
from jax.experimental import pallas as pl
from jax.experimental import pallas as _pl_unused  # noqa: F401
from jax.experimental.pallas import tpu as pltpu  # noqa: F401  (not needed at this size)


# -----------------------------------------------------------------------------
# Kernel
# -----------------------------------------------------------------------------
def _layernorm(x, gamma, beta, eps=1e-5):
    mean = jnp.mean(x, axis=-1, keepdims=True)
    var = jnp.mean((x - mean) ** 2, axis=-1, keepdims=True)
    return (x - mean) * jax.lax.rsqrt(var + eps) * gamma + beta


def encoder_layer_kernel(x_ref, pos_ref, wqk_ref, wv_ref, wo_ref, dpar_ref,
                         bqk_ref, w1_ref, b1_ref, w2_ref, out_ref,
                         *, nhead, batch, seq):
    """Single invocation over the whole flattened (B*S, D) activation slab.

    x_ref   : (B*S, D)  src, batch-major rows
    pos_ref : (B*S, D)  positional embedding tiled over batch
    wqk_ref : (D, 2D)   fused q|k projection weights, (in, out)
    wv_ref  : (D, D)    v projection weights, (in, out)
    wo_ref  : (D, D)    out_proj weights, (in, out)
    dpar_ref: (7, D)    [bv, out_proj bias, g1, be1, g2, be2, b2]
    bqk_ref : (1, 2D)   fused q|k biases
    w1_ref  : (D, F), b1_ref: (1, F), w2_ref: (F, D)
    """
    f32 = jnp.float32
    BS, D = x_ref.shape
    S = seq
    B = batch
    hd = D // nhead
    scale = 1.0 / math.sqrt(hd)

    x = x_ref[...].astype(f32)                       # (BS, D)
    xpe = x + pos_ref[...].astype(f32)               # q = k source; value = x

    bv = dpar_ref[0:1, :]
    bo = dpar_ref[1:2, :]
    g1 = dpar_ref[2:3, :]
    be1 = dpar_ref[3:4, :]
    g2 = dpar_ref[4:5, :]
    be2 = dpar_ref[5:6, :]
    b2 = dpar_ref[6:7, :]

    # ---- fused projections: 2 wide matmuls over the whole slab -------------
    qk = jnp.dot(xpe, wqk_ref[...], preferred_element_type=f32) + bqk_ref[...]  # (BS, 2D)
    v = jnp.dot(x, wv_ref[...], preferred_element_type=f32) + bv                # (BS, D)

    # ---- per-(batch, head) score tiles, stacked along sublanes -------------
    scores = []
    for b in range(B):                               # tiny static unrolls
        r0 = b * S
        for h in range(nhead):
            c0 = h * hd
            qh = qk[r0:r0 + S, c0:c0 + hd]           # (S, hd) lane slice
            kh = qk[r0:r0 + S, D + c0:D + c0 + hd]   # (S, hd)
            s = jax.lax.dot_general(qh, kh, (((1,), (1,)), ((), ())),
                                    preferred_element_type=f32) * scale  # (S, S)
            scores.append(s)
    s_all = jnp.concatenate(scores, axis=0)          # (B*H*S, S) sublane stack

    # ---- one batched softmax across all (b, h) tiles ------------------------
    s_all = s_all - jnp.max(s_all, axis=-1, keepdims=True)
    p_all = jnp.exp(s_all)
    denom = jnp.sum(p_all, axis=-1, keepdims=True)
    r = pl.reciprocal(denom, approx=True)            # EUP slot (free next to VPU)
    r = r * (2.0 - denom * r)                        # one Newton step -> ~f32 exact
    p_all = p_all * r

    # ---- PV matmuls; lane-concat heads, sublane-concat batches --------------
    rows = []
    for b in range(B):
        r0 = b * S
        head_outs = []
        for h in range(nhead):
            idx = b * nhead + h
            p = p_all[idx * S:(idx + 1) * S, :]                 # (S, S)
            vh = v[r0:r0 + S, h * hd:(h + 1) * hd]              # (S, hd)
            head_outs.append(jnp.dot(p, vh, preferred_element_type=f32))
        rows.append(jnp.concatenate(head_outs, axis=1))         # (S, D)
    ctx = jnp.concatenate(rows, axis=0)                          # (BS, D)

    # ---- single out-proj matmul over the whole slab -------------------------
    attn = jnp.dot(ctx, wo_ref[...], preferred_element_type=f32) + bo

    # residual + norm1   (dropout1 == identity)
    x1 = _layernorm(x + attn, g1, be1)

    # FFN: linear1 -> ReLU -> linear2   (dropout == identity)
    ff = jnp.dot(x1, w1_ref[...], preferred_element_type=f32) + b1_ref[...]
    ff = jnp.maximum(ff, 0.0)
    ff = jnp.dot(ff, w2_ref[...], preferred_element_type=f32) + b2

    # residual + norm2   (dropout2 == identity)
    out = _layernorm(x1 + ff, g2, be2)

    # One contiguous full-block store of the whole (B*S, D) output.
    out_ref[...] = out.astype(out_ref.dtype)


# -----------------------------------------------------------------------------
# Wrapper
# -----------------------------------------------------------------------------
def transformer_encoder_layer(src_sbd, pos, params, nhead):
    """src_sbd: (S, B, D) float32, pos: (S, D) float32 -> (S, B, D)."""
    S, B, D = src_sbd.shape
    F = params["w1"].shape[0]
    assert D % nhead == 0

    # One-time, load-time weight repack into lane-dense fused layouts.
    Wq, Wk, Wv = jnp.split(params["in_proj_w"], 3, axis=0)      # each (D, D)
    bq, bk, bv = jnp.split(params["in_proj_b"], 3, axis=0)      # each (D,)

    wqk = jnp.concatenate([Wq.T, Wk.T], axis=1)                 # (D, 2D)
    wv = Wv.T                                                   # (D, D)
    wo = params["out_proj_w"].T                                 # (D, D)
    bqk = jnp.concatenate([bq, bk]).reshape(1, 2 * D)           # (1, 2D)

    # Pack all D-wide vectors into one small array (fewer tiny DMA inputs).
    dpar = jnp.stack([bv, params["out_proj_b"], params["g1"], params["be1"],
                      params["g2"], params["be2"], params["b2"]], axis=0)  # (7, D)

    w1 = params["w1"].T                  # (D, F)
    b1 = params["b1"].reshape(1, F)      # (1, F)
    w2 = params["w2"].T                  # (F, D)

    # Flatten batch into sublanes: (S, B, D) -> (B*S, D), batch-major rows.
    x = jnp.transpose(src_sbd, (1, 0, 2)).reshape(B * S, D)
    pos_t = jnp.tile(pos, (B, 1))                               # (B*S, D)

    # Single grid-free invocation: every operand is a whole-array VMEM block.
    out_flat = pl.pallas_call(
        functools.partial(encoder_layer_kernel, nhead=nhead, batch=B, seq=S),
        out_shape=jax.ShapeDtypeStruct((B * S, D), src_sbd.dtype),
    )(x, pos_t, wqk, wv, wo, dpar, bqk, w1, b1, w2)

    # Back to the PyTorch-native (S, B, D) layout.
    return jnp.transpose(out_flat.reshape(B, S, D), (1, 0, 2))


# -----------------------------------------------------------------------------
# Pure-JAX reference (for correctness check)
# -----------------------------------------------------------------------------
def reference(src_sbd, pos, params, nhead):
    S, B, D = src_sbd.shape
    hd = D // nhead
    x = src_sbd
    pe = x + pos[:, None, :]
    Wq, Wk, Wv = jnp.split(params["in_proj_w"], 3, axis=0)
    bq, bk, bv = jnp.split(params["in_proj_b"], 3, axis=0)
    q = pe @ Wq.T + bq
    k = pe @ Wk.T + bk
    v = x @ Wv.T + bv

    def split_heads(t):
        return t.reshape(S, B, nhead, hd).transpose(1, 2, 0, 3)  # (B, H, S, hd)

    qh, kh, vh = split_heads(q), split_heads(k), split_heads(v)
    scores = jnp.einsum('bhqd,bhkd->bhqk', qh, kh) / jnp.sqrt(hd)
    p = jax.nn.softmax(scores, axis=-1)
    o = jnp.einsum('bhqk,bhkd->bhqd', p, vh)
    o = o.transpose(2, 0, 1, 3).reshape(S, B, D)
    o = o @ params["out_proj_w"].T + params["out_proj_b"]

    def ln(t, g, b, eps=1e-5):
        m = jnp.mean(t, -1, keepdims=True)
        vv = jnp.mean((t - m) ** 2, -1, keepdims=True)
        return (t - m) / jnp.sqrt(vv + eps) * g + b

    x1 = ln(x + o, params["g1"], params["be1"])
    ff = jax.nn.relu(x1 @ params["w1"].T + params["b1"])
    ff = ff @ params["w2"].T + params["b2"]
    return ln(x1 + ff, params["g2"], params["be2"])


# -----------------------------------------------------------------------------
# Main
# -----------------------------------------------------------------------------
if __name__ == "__main__":
    S, B, D, H, F = 8, 2, 32, 4, 64   # seq, batch, d_model, nhead, dim_feedforward

    key = jax.random.PRNGKey(0)
    ks = jax.random.split(key, 12)
    params = {
        "in_proj_w":  0.05 * jax.random.normal(ks[0], (3 * D, D), jnp.float32),
        "in_proj_b":  0.01 * jax.random.normal(ks[1], (3 * D,), jnp.float32),
        "out_proj_w": 0.05 * jax.random.normal(ks[2], (D, D), jnp.float32),
        "out_proj_b": 0.01 * jax.random.normal(ks[3], (D,), jnp.float32),
        "w1":         0.05 * jax.random.normal(ks[4], (F, D), jnp.float32),
        "b1":         0.01 * jax.random.normal(ks[5], (F,), jnp.float32),
        "w2":         0.05 * jax.random.normal(ks[6], (D, F), jnp.float32),
        "b2":         0.01 * jax.random.normal(ks[7], (D,), jnp.float32),
        "g1":  jnp.ones((D,), jnp.float32),
        "be1": jnp.zeros((D,), jnp.float32),
        "g2":  jnp.ones((D,), jnp.float32),
        "be2": jnp.zeros((D,), jnp.float32),
    }

    src = jax.random.normal(ks[8], (S, B, D), jnp.float32)   # (seq, batch, d_model)
    pos = jax.random.normal(ks[9], (S, D), jnp.float32)      # (seq, d_model)

    out = transformer_encoder_layer(src, pos, params, nhead=H)
    out = jax.block_until_ready(out)

    ref = reference(src, pos, params, nhead=H)
    assert out.shape == (S, B, D)
    assert jnp.allclose(out, ref, atol=1e-4, rtol=1e-4), "mismatch vs reference"

    # TODO(synk): dropout layers are identity (eval mode); training-time dropout is stochastic.
    print("KERNEL_OK")
</pallas_src>

<mosaic_0001>
module attributes {stable_mosaic.version = 11 : i64} {
  func.func @encoder_layer_kernel(%arg0: memref<16x32xf32, #tpu.memory_space<vmem>>, %arg1: memref<16x32xf32, #tpu.memory_space<vmem>>, %arg2: memref<32x64xf32, #tpu.memory_space<vmem>>, %arg3: memref<32x32xf32, #tpu.memory_space<vmem>>, %arg4: memref<32x32xf32, #tpu.memory_space<vmem>>, %arg5: memref<7x32xf32, #tpu.memory_space<vmem>>, %arg6: memref<1x64xf32, #tpu.memory_space<vmem>>, %arg7: memref<32x64xf32, #tpu.memory_space<vmem>>, %arg8: memref<1x64xf32, #tpu.memory_space<vmem>>, %arg9: memref<64x32xf32, #tpu.memory_space<vmem>>, %arg10: memref<16x32xf32, #tpu.memory_space<vmem>>) attributes {dimension_semantics = [], scalar_prefetch = 0 : i64, scratch_operands = 0 : i64, tpu.core_type = #tpu.core_type<tc>} {
    %c0 = arith.constant 0 : index
    %c0_0 = arith.constant 0 : index
    %0 = vector.load %arg0[%c0, %c0_0] : memref<16x32xf32, #tpu.memory_space<vmem>>, vector<16x32xf32>
    %c0_1 = arith.constant 0 : index
    %c0_2 = arith.constant 0 : index
    %1 = vector.load %arg1[%c0_1, %c0_2] : memref<16x32xf32, #tpu.memory_space<vmem>>, vector<16x32xf32>
    %2 = arith.addf %0, %1 : vector<16x32xf32>
    %c0_3 = arith.constant 0 : index
    %c0_4 = arith.constant 0 : index
    %3 = vector.load %arg5[%c0_3, %c0_4] : memref<7x32xf32, #tpu.memory_space<vmem>>, vector<1x32xf32>
    %c1 = arith.constant 1 : index
    %c0_5 = arith.constant 0 : index
    %4 = vector.load %arg5[%c1, %c0_5] : memref<7x32xf32, #tpu.memory_space<vmem>>, vector<1x32xf32>
    %c2 = arith.constant 2 : index
    %c0_6 = arith.constant 0 : index
    %5 = vector.load %arg5[%c2, %c0_6] : memref<7x32xf32, #tpu.memory_space<vmem>>, vector<1x32xf32>
    %c3 = arith.constant 3 : index
    %c0_7 = arith.constant 0 : index
    %6 = vector.load %arg5[%c3, %c0_7] : memref<7x32xf32, #tpu.memory_space<vmem>>, vector<1x32xf32>
    %c4 = arith.constant 4 : index
    %c0_8 = arith.constant 0 : index
    %7 = vector.load %arg5[%c4, %c0_8] : memref<7x32xf32, #tpu.memory_space<vmem>>, vector<1x32xf32>
    %c5 = arith.constant 5 : index
    %c0_9 = arith.constant 0 : index
    %8 = vector.load %arg5[%c5, %c0_9] : memref<7x32xf32, #tpu.memory_space<vmem>>, vector<1x32xf32>
    %c6 = arith.constant 6 : index
    %c0_10 = arith.constant 0 : index
    %9 = vector.load %arg5[%c6, %c0_10] : memref<7x32xf32, #tpu.memory_space<vmem>>, vector<1x32xf32>
    %c0_11 = arith.constant 0 : index
    %c0_12 = arith.constant 0 : index
    %10 = vector.load %arg2[%c0_11, %c0_12] : memref<32x64xf32, #tpu.memory_space<vmem>>, vector<32x64xf32>
    %cst = arith.constant dense<0.000000e+00> : vector<16x64xf32>
    %11 = tpu.matmul %2, %10, %cst {dimension_numbers = #tpu.dot_dimension_numbers<[1], [0], [0], [1], [0, 0, 1, 1], [], []>} : vector<16x32xf32>, vector<32x64xf32>, vector<16x64xf32> -> vector<16x64xf32>
    %c0_13 = arith.constant 0 : index
    %c0_14 = arith.constant 0 : index
    %12 = vector.load %arg6[%c0_13, %c0_14] : memref<1x64xf32, #tpu.memory_space<vmem>>, vector<1x64xf32>
    %13 = vector.broadcast %12 : vector<1x64xf32> to vector<16x64xf32>
    %14 = arith.addf %11, %13 : vector<16x64xf32>
    %c0_15 = arith.constant 0 : index
    %c0_16 = arith.constant 0 : index
    %15 = vector.load %arg3[%c0_15, %c0_16] : memref<32x32xf32, #tpu.memory_space<vmem>>, vector<32x32xf32>
    %cst_17 = arith.constant dense<0.000000e+00> : vector<16x32xf32>
    %16 = tpu.matmul %0, %15, %cst_17 {dimension_numbers = #tpu.dot_dimension_numbers<[1], [0], [0], [1], [0, 0, 1, 1], [], []>} : vector<16x32xf32>, vector<32x32xf32>, vector<16x32xf32> -> vector<16x32xf32>
    %17 = vector.broadcast %3 : vector<1x32xf32> to vector<16x32xf32>
    %18 = arith.addf %16, %17 : vector<16x32xf32>
    %19 = vector.extract_strided_slice %14 {offsets = [0, 0], sizes = [8, 8], strides = [1, 1]} : vector<16x64xf32> to vector<8x8xf32>
    %20 = vector.extract_strided_slice %14 {offsets = [0, 32], sizes = [8, 8], strides = [1, 1]} : vector<16x64xf32> to vector<8x8xf32>
    %cst_18 = arith.constant dense<0.000000e+00> : vector<8x8xf32>
    %21 = tpu.matmul %19, %20, %cst_18 {dimension_numbers = #tpu.dot_dimension_numbers<[1], [1], [0], [0], [0, 0, 1, 0], [], []>} : vector<8x8xf32>, vector<8x8xf32>, vector<8x8xf32> -> vector<8x8xf32>
    %cst_19 = arith.constant 0.353553385 : f32
    %22 = vector.broadcast %cst_19 : f32 to vector<8x8xf32>
    %23 = arith.mulf %21, %22 : vector<8x8xf32>
    %24 = vector.extract_strided_slice %14 {offsets = [0, 8], sizes = [8, 8], strides = [1, 1]} : vector<16x64xf32> to vector<8x8xf32>
    %25 = vector.extract_strided_slice %14 {offsets = [0, 40], sizes = [8, 8], strides = [1, 1]} : vector<16x64xf32> to vector<8x8xf32>
    %cst_20 = arith.constant dense<0.000000e+00> : vector<8x8xf32>
    %26 = tpu.matmul %24, %25, %cst_20 {dimension_numbers = #tpu.dot_dimension_numbers<[1], [1], [0], [0], [0, 0, 1, 0], [], []>} : vector<8x8xf32>, vector<8x8xf32>, vector<8x8xf32> -> vector<8x8xf32>
    %cst_21 = arith.constant 0.353553385 : f32
    %27 = vector.broadcast %cst_21 : f32 to vector<8x8xf32>
    %28 = arith.mulf %26, %27 : vector<8x8xf32>
    %29 = vector.extract_strided_slice %14 {offsets = [0, 16], sizes = [8, 8], strides = [1, 1]} : vector<16x64xf32> to vector<8x8xf32>
    %30 = vector.extract_strided_slice %14 {offsets = [0, 48], sizes = [8, 8], strides = [1, 1]} : vector<16x64xf32> to vector<8x8xf32>
    %cst_22 = arith.constant dense<0.000000e+00> : vector<8x8xf32>
    %31 = tpu.matmul %29, %30, %cst_22 {dimension_numbers = #tpu.dot_dimension_numbers<[1], [1], [0], [0], [0, 0, 1, 0], [], []>} : vector<8x8xf32>, vector<8x8xf32>, vector<8x8xf32> -> vector<8x8xf32>
    %cst_23 = arith.constant 0.353553385 : f32
    %32 = vector.broadcast %cst_23 : f32 to vector<8x8xf32>
    %33 = arith.mulf %31, %32 : vector<8x8xf32>
    %34 = vector.extract_strided_slice %14 {offsets = [0, 24], sizes = [8, 8], strides = [1, 1]} : vector<16x64xf32> to vector<8x8xf32>
    %35 = vector.extract_strided_slice %14 {offsets = [0, 56], sizes = [8, 8], strides = [1, 1]} : vector<16x64xf32> to vector<8x8xf32>
    %cst_24 = arith.constant dense<0.000000e+00> : vector<8x8xf32>
    %36 = tpu.matmul %34, %35, %cst_24 {dimension_numbers = #tpu.dot_dimension_numbers<[1], [1], [0], [0], [0, 0, 1, 0], [], []>} : vector<8x8xf32>, vector<8x8xf32>, vector<8x8xf32> -> vector<8x8xf32>
    %cst_25 = arith.constant 0.353553385 : f32
    %37 = vector.broadcast %cst_25 : f32 to vector<8x8xf32>
    %38 = arith.mulf %36, %37 : vector<8x8xf32>
    %39 = vector.extract_strided_slice %14 {offsets = [8, 0], sizes = [8, 8], strides = [1, 1]} : vector<16x64xf32> to vector<8x8xf32>
    %40 = vector.extract_strided_slice %14 {offsets = [8, 32], sizes = [8, 8], strides = [1, 1]} : vector<16x64xf32> to vector<8x8xf32>
    %cst_26 = arith.constant dense<0.000000e+00> : vector<8x8xf32>
    %41 = tpu.matmul %39, %40, %cst_26 {dimension_numbers = #tpu.dot_dimension_numbers<[1], [1], [0], [0], [0, 0, 1, 0], [], []>} : vector<8x8xf32>, vector<8x8xf32>, vector<8x8xf32> -> vector<8x8xf32>
    %cst_27 = arith.constant 0.353553385 : f32
    %42 = vector.broadcast %cst_27 : f32 to vector<8x8xf32>
    %43 = arith.mulf %41, %42 : vector<8x8xf32>
    %44 = vector.extract_strided_slice %14 {offsets = [8, 8], sizes = [8, 8], strides = [1, 1]} : vector<16x64xf32> to vector<8x8xf32>
    %45 = vector.extract_strided_slice %14 {offsets = [8, 40], sizes = [8, 8], strides = [1, 1]} : vector<16x64xf32> to vector<8x8xf32>
    %cst_28 = arith.constant dense<0.000000e+00> : vector<8x8xf32>
    %46 = tpu.matmul %44, %45, %cst_28 {dimension_numbers = #tpu.dot_dimension_numbers<[1], [1], [0], [0], [0, 0, 1, 0], [], []>} : vector<8x8xf32>, vector<8x8xf32>, vector<8x8xf32> -> vector<8x8xf32>
    %cst_29 = arith.constant 0.353553385 : f32
    %47 = vector.broadcast %cst_29 : f32 to vector<8x8xf32>
    %48 = arith.mulf %46, %47 : vector<8x8xf32>
    %49 = vector.extract_strided_slice %14 {offsets = [8, 16], sizes = [8, 8], strides = [1, 1]} : vector<16x64xf32> to vector<8x8xf32>
    %50 = vector.extract_strided_slice %14 {offsets = [8, 48], sizes = [8, 8], strides = [1, 1]} : vector<16x64xf32> to vector<8x8xf32>
    %cst_30 = arith.constant dense<0.000000e+00> : vector<8x8xf32>
    %51 = tpu.matmul %49, %50, %cst_30 {dimension_numbers = #tpu.dot_dimension_numbers<[1], [1], [0], [0], [0, 0, 1, 0], [], []>} : vector<8x8xf32>, vector<8x8xf32>, vector<8x8xf32> -> vector<8x8xf32>
    %cst_31 = arith.constant 0.353553385 : f32
    %52 = vector.broadcast %cst_31 : f32 to vector<8x8xf32>
    %53 = arith.mulf %51, %52 : vector<8x8xf32>
    %54 = vector.extract_strided_slice %14 {offsets = [8, 24], sizes = [8, 8], strides = [1, 1]} : vector<16x64xf32> to vector<8x8xf32>
    %55 = vector.extract_strided_slice %14 {offsets = [8, 56], sizes = [8, 8], strides = [1, 1]} : vector<16x64xf32> to vector<8x8xf32>
    %cst_32 = arith.constant dense<0.000000e+00> : vector<8x8xf32>
    %56 = tpu.matmul %54, %55, %cst_32 {dimension_numbers = #tpu.dot_dimension_numbers<[1], [1], [0], [0], [0, 0, 1, 0], [], []>} : vector<8x8xf32>, vector<8x8xf32>, vector<8x8xf32> -> vector<8x8xf32>
    %cst_33 = arith.constant 0.353553385 : f32
    %57 = vector.broadcast %cst_33 : f32 to vector<8x8xf32>
    %58 = arith.mulf %56, %57 : vector<8x8xf32>
    %59 = tpu.concatenate %23, %28, %33, %38, %43, %48, %53, %58 in 0 : vector<8x8xf32>, vector<8x8xf32>, vector<8x8xf32>, vector<8x8xf32>, vector<8x8xf32>, vector<8x8xf32>, vector<8x8xf32>, vector<8x8xf32> -> vector<64x8xf32>
    %cst_34 = arith.constant dense<0xFF800000> : vector<64xf32>
    %60 = vector.multi_reduction <maximumf>, %59, %cst_34 [1] : vector<64x8xf32> to vector<64xf32>
    %61 = vector.shape_cast %60 : vector<64xf32> to vector<64x1xf32>
    %62 = vector.broadcast %61 : vector<64x1xf32> to vector<64x8xf32>
    %63 = arith.subf %59, %62 : vector<64x8xf32>
    %64 = math.exp %63 : vector<64x8xf32>
    %cst_35 = arith.constant dense<0.000000e+00> : vector<64xf32>
    %65 = vector.multi_reduction <add>, %64, %cst_35 [1] : vector<64x8xf32> to vector<64xf32>
    %66 = vector.shape_cast %65 : vector<64xf32> to vector<64x1xf32>
    %67 = tpu.reciprocal %66 {approx = true} : vector<64x1xf32> -> vector<64x1xf32>
    %68 = arith.mulf %66, %67 : vector<64x1xf32>
    %cst_36 = arith.constant 2.000000e+00 : f32
    %69 = vector.broadcast %cst_36 : f32 to vector<64x1xf32>
    %70 = arith.subf %69, %68 : vector<64x1xf32>
    %71 = arith.mulf %67, %70 : vector<64x1xf32>
    %72 = vector.broadcast %71 : vector<64x1xf32> to vector<64x8xf32>
    %73 = arith.mulf %64, %72 : vector<64x8xf32>
    %74 = vector.extract_strided_slice %73 {offsets = [0, 0], sizes = [8, 8], strides = [1, 1]} : vector<64x8xf32> to vector<8x8xf32>
    %75 = vector.extract_strided_slice %18 {offsets = [0, 0], sizes = [8, 8], strides = [1, 1]} : vector<16x32xf32> to vector<8x8xf32>
    %cst_37 = arith.constant dense<0.000000e+00> : vector<8x8xf32>
    %76 = tpu.matmul %74, %75, %cst_37 {dimension_numbers = #tpu.dot_dimension_numbers<[1], [0], [0], [1], [0, 0, 1, 1], [], []>} : vector<8x8xf32>, vector<8x8xf32>, vector<8x8xf32> -> vector<8x8xf32>
    %77 = vector.extract_strided_slice %73 {offsets = [8, 0], sizes = [8, 8], strides = [1, 1]} : vector<64x8xf32> to vector<8x8xf32>
    %78 = vector.extract_strided_slice %18 {offsets = [0, 8], sizes = [8, 8], strides = [1, 1]} : vector<16x32xf32> to vector<8x8xf32>
    %cst_38 = arith.constant dense<0.000000e+00> : vector<8x8xf32>
    %79 = tpu.matmul %77, %78, %cst_38 {dimension_numbers = #tpu.dot_dimension_numbers<[1], [0], [0], [1], [0, 0, 1, 1], [], []>} : vector<8x8xf32>, vector<8x8xf32>, vector<8x8xf32> -> vector<8x8xf32>
    %80 = vector.extract_strided_slice %73 {offsets = [16, 0], sizes = [8, 8], strides = [1, 1]} : vector<64x8xf32> to vector<8x8xf32>
    %81 = vector.extract_strided_slice %18 {offsets = [0, 16], sizes = [8, 8], strides = [1, 1]} : vector<16x32xf32> to vector<8x8xf32>
    %cst_39 = arith.constant dense<0.000000e+00> : vector<8x8xf32>
    %82 = tpu.matmul %80, %81, %cst_39 {dimension_numbers = #tpu.dot_dimension_numbers<[1], [0], [0], [1], [0, 0, 1, 1], [], []>} : vector<8x8xf32>, vector<8x8xf32>, vector<8x8xf32> -> vector<8x8xf32>
    %83 = vector.extract_strided_slice %73 {offsets = [24, 0], sizes = [8, 8], strides = [1, 1]} : vector<64x8xf32> to vector<8x8xf32>
    %84 = vector.extract_strided_slice %18 {offsets = [0, 24], sizes = [8, 8], strides = [1, 1]} : vector<16x32xf32> to vector<8x8xf32>
    %cst_40 = arith.constant dense<0.000000e+00> : vector<8x8xf32>
    %85 = tpu.matmul %83, %84, %cst_40 {dimension_numbers = #tpu.dot_dimension_numbers<[1], [0], [0], [1], [0, 0, 1, 1], [], []>} : vector<8x8xf32>, vector<8x8xf32>, vector<8x8xf32> -> vector<8x8xf32>
    %86 = tpu.concatenate %76, %79, %82, %85 in 1 : vector<8x8xf32>, vector<8x8xf32>, vector<8x8xf32>, vector<8x8xf32> -> vector<8x32xf32>
    %87 = vector.extract_strided_slice %73 {offsets = [32, 0], sizes = [8, 8], strides = [1, 1]} : vector<64x8xf32> to vector<8x8xf32>
    %88 = vector.extract_strided_slice %18 {offsets = [8, 0], sizes = [8, 8], strides = [1, 1]} : vector<16x32xf32> to vector<8x8xf32>
    %cst_41 = arith.constant dense<0.000000e+00> : vector<8x8xf32>
    %89 = tpu.matmul %87, %88, %cst_41 {dimension_numbers = #tpu.dot_dimension_numbers<[1], [0], [0], [1], [0, 0, 1, 1], [], []>} : vector<8x8xf32>, vector<8x8xf32>, vector<8x8xf32> -> vector<8x8xf32>
    %90 = vector.extract_strided_slice %73 {offsets = [40, 0], sizes = [8, 8], strides = [1, 1]} : vector<64x8xf32> to vector<8x8xf32>
    %91 = vector.extract_strided_slice %18 {offsets = [8, 8], sizes = [8, 8], strides = [1, 1]} : vector<16x32xf32> to vector<8x8xf32>
    %cst_42 = arith.constant dense<0.000000e+00> : vector<8x8xf32>
    %92 = tpu.matmul %90, %91, %cst_42 {dimension_numbers = #tpu.dot_dimension_numbers<[1], [0], [0], [1], [0, 0, 1, 1], [], []>} : vector<8x8xf32>, vector<8x8xf32>, vector<8x8xf32> -> vector<8x8xf32>
    %93 = vector.extract_strided_slice %73 {offsets = [48, 0], sizes = [8, 8], strides = [1, 1]} : vector<64x8xf32> to vector<8x8xf32>
    %94 = vector.extract_strided_slice %18 {offsets = [8, 16], sizes = [8, 8], strides = [1, 1]} : vector<16x32xf32> to vector<8x8xf32>
    %cst_43 = arith.constant dense<0.000000e+00> : vector<8x8xf32>
    %95 = tpu.matmul %93, %94, %cst_43 {dimension_numbers = #tpu.dot_dimension_numbers<[1], [0], [0], [1], [0, 0, 1, 1], [], []>} : vector<8x8xf32>, vector<8x8xf32>, vector<8x8xf32> -> vector<8x8xf32>
    %96 = vector.extract_strided_slice %73 {offsets = [56, 0], sizes = [8, 8], strides = [1, 1]} : vector<64x8xf32> to vector<8x8xf32>
    %97 = vector.extract_strided_slice %18 {offsets = [8, 24], sizes = [8, 8], strides = [1, 1]} : vector<16x32xf32> to vector<8x8xf32>
    %cst_44 = arith.constant dense<0.000000e+00> : vector<8x8xf32>
    %98 = tpu.matmul %96, %97, %cst_44 {dimension_numbers = #tpu.dot_dimension_numbers<[1], [0], [0], [1], [0, 0, 1, 1], [], []>} : vector<8x8xf32>, vector<8x8xf32>, vector<8x8xf32> -> vector<8x8xf32>
    %99 = tpu.concatenate %89, %92, %95, %98 in 1 : vector<8x8xf32>, vector<8x8xf32>, vector<8x8xf32>, vector<8x8xf32> -> vector<8x32xf32>
    %100 = tpu.concatenate %86, %99 in 0 : vector<8x32xf32>, vector<8x32xf32> -> vector<16x32xf32>
    %c0_45 = arith.constant 0 : index
    %c0_46 = arith.constant 0 : index
    %101 = vector.load %arg4[%c0_45, %c0_46] : memref<32x32xf32, #tpu.memory_space<vmem>>, vector<32x32xf32>
    %cst_47 = arith.constant dense<0.000000e+00> : vector<16x32xf32>
    %102 = tpu.matmul %100, %101, %cst_47 {dimension_numbers = #tpu.dot_dimension_numbers<[1], [0], [0], [1], [0, 0, 1, 1], [], []>} : vector<16x32xf32>, vector<32x32xf32>, vector<16x32xf32> -> vector<16x32xf32>
    %103 = vector.broadcast %4 : vector<1x32xf32> to vector<16x32xf32>
    %104 = arith.addf %102, %103 : vector<16x32xf32>
    %105 = arith.addf %0, %104 : vector<16x32xf32>
    %cst_48 = arith.constant dense<0.000000e+00> : vector<16xf32>
    %106 = vector.multi_reduction <add>, %105, %cst_48 [1] : vector<16x32xf32> to vector<16xf32>
    %107 = vector.shape_cast %106 : vector<16xf32> to vector<16x1xf32>
    %cst_49 = arith.constant 3.200000e+01 : f32
    %108 = vector.broadcast %cst_49 : f32 to vector<16x1xf32>
    %109 = arith.divf %107, %108 : vector<16x1xf32>
    %110 = vector.broadcast %109 : vector<16x1xf32> to vector<16x32xf32>
    %111 = arith.subf %105, %110 : vector<16x32xf32>
    %112 = arith.mulf %111, %111 : vector<16x32xf32>
    %cst_50 = arith.constant dense<0.000000e+00> : vector<16xf32>
    %113 = vector.multi_reduction <add>, %112, %cst_50 [1] : vector<16x32xf32> to vector<16xf32>
    %114 = vector.shape_cast %113 : vector<16xf32> to vector<16x1xf32>
    %cst_51 = arith.constant 3.200000e+01 : f32
    %115 = vector.broadcast %cst_51 : f32 to vector<16x1xf32>
    %116 = arith.divf %114, %115 : vector<16x1xf32>
    %117 = vector.broadcast %109 : vector<16x1xf32> to vector<16x32xf32>
    %118 = arith.subf %105, %117 : vector<16x32xf32>
    %cst_52 = arith.constant 9.99999974E-6 : f32
    %119 = vector.broadcast %cst_52 : f32 to vector<16x1xf32>
    %120 = arith.addf %116, %119 : vector<16x1xf32>
    %121 = math.rsqrt %120 : vector<16x1xf32>
    %122 = vector.broadcast %121 : vector<16x1xf32> to vector<16x32xf32>
    %123 = arith.mulf %118, %122 : vector<16x32xf32>
    %124 = vector.broadcast %5 : vector<1x32xf32> to vector<16x32xf32>
    %125 = arith.mulf %123, %124 : vector<16x32xf32>
    %126 = vector.broadcast %6 : vector<1x32xf32> to vector<16x32xf32>
    %127 = arith.addf %125, %126 : vector<16x32xf32>
    %c0_53 = arith.constant 0 : index
    %c0_54 = arith.constant 0 : index
    %128 = vector.load %arg7[%c0_53, %c0_54] : memref<32x64xf32, #tpu.memory_space<vmem>>, vector<32x64xf32>
    %cst_55 = arith.constant dense<0.000000e+00> : vector<16x64xf32>
    %129 = tpu.matmul %127, %128, %cst_55 {dimension_numbers = #tpu.dot_dimension_numbers<[1], [0], [0], [1], [0, 0, 1, 1], [], []>} : vector<16x32xf32>, vector<32x64xf32>, vector<16x64xf32> -> vector<16x64xf32>
    %c0_56 = arith.constant 0 : index
    %c0_57 = arith.constant 0 : index
    %130 = vector.load %arg8[%c0_56, %c0_57] : memref<1x64xf32, #tpu.memory_space<vmem>>, vector<1x64xf32>
    %131 = vector.broadcast %130 : vector<1x64xf32> to vector<16x64xf32>
    %132 = arith.addf %129, %131 : vector<16x64xf32>
    %cst_58 = arith.constant 0.000000e+00 : f32
    %133 = vector.broadcast %cst_58 : f32 to vector<16x64xf32>
    %134 = arith.maximumf %132, %133 : vector<16x64xf32>
    %c0_59 = arith.constant 0 : index
    %c0_60 = arith.constant 0 : index
    %135 = vector.load %arg9[%c0_59, %c0_60] : memref<64x32xf32, #tpu.memory_space<vmem>>, vector<64x32xf32>
    %cst_61 = arith.constant dense<0.000000e+00> : vector<16x32xf32>
    %136 = tpu.matmul %134, %135, %cst_61 {dimension_numbers = #tpu.dot_dimension_numbers<[1], [0], [0], [1], [0, 0, 1, 1], [], []>} : vector<16x64xf32>, vector<64x32xf32>, vector<16x32xf32> -> vector<16x32xf32>
    %137 = vector.broadcast %9 : vector<1x32xf32> to vector<16x32xf32>
    %138 = arith.addf %136, %137 : vector<16x32xf32>
    %139 = arith.addf %127, %138 : vector<16x32xf32>
    %cst_62 = arith.constant dense<0.000000e+00> : vector<16xf32>
    %140 = vector.multi_reduction <add>, %139, %cst_62 [1] : vector<16x32xf32> to vector<16xf32>
    %141 = vector.shape_cast %140 : vector<16xf32> to vector<16x1xf32>
    %cst_63 = arith.constant 3.200000e+01 : f32
    %142 = vector.broadcast %cst_63 : f32 to vector<16x1xf32>
    %143 = arith.divf %141, %142 : vector<16x1xf32>
    %144 = vector.broadcast %143 : vector<16x1xf32> to vector<16x32xf32>
    %145 = arith.subf %139, %144 : vector<16x32xf32>
    %146 = arith.mulf %145, %145 : vector<16x32xf32>
    %cst_64 = arith.constant dense<0.000000e+00> : vector<16xf32>
    %147 = vector.multi_reduction <add>, %146, %cst_64 [1] : vector<16x32xf32> to vector<16xf32>
    %148 = vector.shape_cast %147 : vector<16xf32> to vector<16x1xf32>
    %cst_65 = arith.constant 3.200000e+01 : f32
    %149 = vector.broadcast %cst_65 : f32 to vector<16x1xf32>
    %150 = arith.divf %148, %149 : vector<16x1xf32>
    %151 = vector.broadcast %143 : vector<16x1xf32> to vector<16x32xf32>
    %152 = arith.subf %139, %151 : vector<16x32xf32>
    %cst_66 = arith.constant 9.99999974E-6 : f32
    %153 = vector.broadcast %cst_66 : f32 to vector<16x1xf32>
    %154 = arith.addf %150, %153 : vector<16x1xf32>
    %155 = math.rsqrt %154 : vector<16x1xf32>
    %156 = vector.broadcast %155 : vector<16x1xf32> to vector<16x32xf32>
    %157 = arith.mulf %152, %156 : vector<16x32xf32>
    %158 = vector.broadcast %7 : vector<1x32xf32> to vector<16x32xf32>
    %159 = arith.mulf %157, %158 : vector<16x32xf32>
    %160 = vector.broadcast %8 : vector<1x32xf32> to vector<16x32xf32>
    %161 = arith.addf %159, %160 : vector<16x32xf32>
    %c0_67 = arith.constant 0 : index
    %c0_68 = arith.constant 0 : index
    %162 = vector.load %arg10[%c0_67, %c0_68] : memref<16x32xf32, #tpu.memory_space<vmem>>, vector<16x32xf32>
    tpu.vector_store %arg10[%c0_67, %c0_68], %161 {strides = array<i32>} : memref<16x32xf32, #tpu.memory_space<vmem>>, vector<16x32xf32>,
    return
  }
}

</mosaic_0001>

<llo_original>
// kernel: tpu_custom_call.1
$region0: #{tpu_custom_call.1}
  #allocation0 [shape = 'u32[]', space=smem, size = 0x4, offset = 0x4, fixed_abs, tag = 'smem constant byte address 0x4 - core index']
  #allocation1 [shape = 'u32[72,128]{1,0:T(1,128)}', space=vmem, size = 0x9000, scoped, tag = 'internal scratch']
  %s0 = inlined_call_operand.hbm [shape: f32[16,32], index: 0, kind: input, shape index: {}]
  %s1 = inlined_call_operand.hbm [shape: f32[16,32], index: 1, kind: input, shape index: {}]
  %s2 = inlined_call_operand.vmem [shape: f32[32,64], index: 2, kind: input, shape index: {}]
  %s3 = inlined_call_operand.vmem [shape: f32[32,32], index: 3, kind: input, shape index: {}]
  %s4 = inlined_call_operand.vmem [shape: f32[32,32], index: 4, kind: input, shape index: {}]
  %s5 = inlined_call_operand.hbm [shape: f32[7,32], index: 5, kind: input, shape index: {}]
  %s6 = inlined_call_operand.vmem [shape: f32[1,64], index: 6, kind: input, shape index: {}]
  %s7 = inlined_call_operand.hbm [shape: f32[32,64], index: 7, kind: input, shape index: {}]
  %s8 = inlined_call_operand.vmem [shape: f32[1,64], index: 8, kind: input, shape index: {}]
  %s9 = inlined_call_operand.vmem [shape: f32[64,32], index: 9, kind: input, shape index: {}]
  %s10 = inlined_call_operand.hbm [shape: f32[16,32], index: 10, kind: output, shape index: {}]
  %s11 = sld [smem:[#allocation0]]
  $region66: #{tpu_custom_call.1} parent=0
    _
  %s13 = ssub.s32 1, %s11
  %s14 = scalar_select 0, %s13, %s11
  $region1: #{tpu_custom_call.1} parent=0
    #allocation2 [shape = 'u8[8192]{0}', space=vmem, size = 0x2000, scoped, tag = 'input window, operand 0, single buffered']
    #allocation3 [shape = 's32[1]{0}', space=sflag, size = 0x4, scoped, tag = 'scoped memory for tpu_custom_call.1']
    #allocation4 [shape = 's32[1]{0}', space=sflag, size = 0x4, scoped, tag = 'scoped memory for tpu_custom_call.1']
    #allocation5 [shape = 'u8[8192]{0}', space=vmem, size = 0x2000, scoped, tag = 'input window, operand 1, single buffered']
    #allocation6 [shape = 's32[1]{0}', space=sflag, size = 0x4, scoped, tag = 'scoped memory for tpu_custom_call.1']
    #allocation7 [shape = 'u8[4096]{0}', space=vmem, size = 0x1000, scoped, tag = 'input window, operand 5, single buffered']
    #allocation8 [shape = 'u8[16384]{0}', space=vmem, size = 0x4000, scoped, tag = 'input window, operand 7, single buffered']
    #allocation9 [shape = 's32[1]{0}', space=sflag, size = 0x4, scoped, tag = 'scoped memory for tpu_custom_call.1']
    #allocation10 [shape = 'u8[8192]{0}', space=vmem, size = 0x2000, scoped, tag = 'output window, operand 0, single buffered']
    %15 = vsyncpa [#allocation3], 0
    %16 = vsyncpa [#allocation6], 0
    %17 = vsyncpa [#allocation9], 0
    %18 = vsyncpa [#allocation4], 0
    // Predicated region
    $region2: #{tpu_custom_call.1} parent=1 // pred_check
      _
    $region3: #{tpu_custom_call.1} parent=1 // pred_check_branch
      %20 = sbr.rel (0) target = $region5
    $region4: #{tpu_custom_call.1} parent=1 // pred_region
      %22 = vsyncadd [#allocation3], 0
      %s23 = sshll.u32 %s0, 4
      %s24 = int_to_ptr.hbm [resolvable:$true] %s23
      %s25 = sshll.u32 [#allocation2], 4
      %s26 = int_to_ptr.vmem [resolvable:$true] %s25
      %31 = dma.hbm_to_vmem [thread:$0]  %s24, 256, %s26, [#allocation3], 128, 128, 8
    $region5: #{tpu_custom_call.1} parent=1 // pred_fallthru
      _
    // Predicated region
    $region6: #{tpu_custom_call.1} parent=1 // pred_check
      _
    $region7: #{tpu_custom_call.1} parent=1 // pred_check_branch
      %33 = sbr.rel (0) target = $region9
    $region8: #{tpu_custom_call.1} parent=1 // pred_region
      %35 = vsyncadd [#allocation6], 0
      %s36 = sshll.u32 %s1, 4
      %s37 = int_to_ptr.hbm [resolvable:$true] %s36
      %s38 = sshll.u32 [#allocation5], 4
      %s39 = int_to_ptr.vmem [resolvable:$true] %s38
      %44 = dma.hbm_to_vmem [thread:$0]  %s37, 256, %s39, [#allocation6], 128, 128, 8
    $region9: #{tpu_custom_call.1} parent=1 // pred_fallthru
      _
    // Predicated region
    $region10: #{tpu_custom_call.1} parent=1 // pred_check
      _
    $region11: #{tpu_custom_call.1} parent=1 // pred_check_branch
      %46 = sbr.rel (0) target = $region13
    $region12: #{tpu_custom_call.1} parent=1 // pred_region
      _
    $region13: #{tpu_custom_call.1} parent=1 // pred_fallthru
      _
    // Predicated region
    $region14: #{tpu_custom_call.1} parent=1 // pred_check
      _
    $region15: #{tpu_custom_call.1} parent=1 // pred_check_branch
      %48 = sbr.rel (0) target = $region17
    $region16: #{tpu_custom_call.1} parent=1 // pred_region
      _
    $region17: #{tpu_custom_call.1} parent=1 // pred_fallthru
      _
    // Predicated region
    $region18: #{tpu_custom_call.1} parent=1 // pred_check
      _
    $region19: #{tpu_custom_call.1} parent=1 // pred_check_branch
      %50 = sbr.rel (0) target = $region21
    $region20: #{tpu_custom_call.1} parent=1 // pred_region
      _
    $region21: #{tpu_custom_call.1} parent=1 // pred_fallthru
      _
    // Predicated region
    $region22: #{tpu_custom_call.1} parent=1 // pred_check
      _
    $region23: #{tpu_custom_call.1} parent=1 // pred_check_branch
      %52 = sbr.rel (0) target = $region25
    $region24: #{tpu_custom_call.1} parent=1 // pred_region
      %54 = vsyncadd [#allocation6], 0
      %s56 = sshll.u32 %s5, 4
      %s57 = int_to_ptr.hbm [resolvable:$true] %s56
      %s58 = sshll.u32 [#allocation7], 4
      %s59 = int_to_ptr.vmem [resolvable:$true] %s58
      %61 = dma.hbm_to_vmem [thread:$0]  %s57, 128, %s59, [#allocation6]
    $region25: #{tpu_custom_call.1} parent=1 // pred_fallthru
      _
    // Predicated region
    $region26: #{tpu_custom_call.1} parent=1 // pred_check
      _
    $region27: #{tpu_custom_call.1} parent=1 // pred_check_branch
      %63 = sbr.rel (0) target = $region29
    $region28: #{tpu_custom_call.1} parent=1 // pred_region
      _
    $region29: #{tpu_custom_call.1} parent=1 // pred_fallthru
      _
    // Predicated region
    $region30: #{tpu_custom_call.1} parent=1 // pred_check
      _
    $region31: #{tpu_custom_call.1} parent=1 // pred_check_branch
      %65 = sbr.rel (0) target = $region33
    $region32: #{tpu_custom_call.1} parent=1 // pred_region
      %67 = vsyncadd [#allocation9], 0
      %s68 = sshll.u32 %s7, 4
      %s69 = int_to_ptr.hbm [resolvable:$true] %s68
      %s70 = sshll.u32 [#allocation8], 4
      %s71 = int_to_ptr.vmem [resolvable:$true] %s70
      %76 = dma.hbm_to_vmem [thread:$0]  %s69, 512, %s71, [#allocation9], 128, 128, 8
    $region33: #{tpu_custom_call.1} parent=1 // pred_fallthru
      _
    // Predicated region
    $region34: #{tpu_custom_call.1} parent=1 // pred_check
      _
    $region35: #{tpu_custom_call.1} parent=1 // pred_check_branch
      %78 = sbr.rel (0) target = $region37
    $region36: #{tpu_custom_call.1} parent=1 // pred_region
      _
    $region37: #{tpu_custom_call.1} parent=1 // pred_fallthru
      _
    // Predicated region
    $region38: #{tpu_custom_call.1} parent=1 // pred_check
      _
    $region39: #{tpu_custom_call.1} parent=1 // pred_check_branch
      %80 = sbr.rel (0) target = $region41
    $region40: #{tpu_custom_call.1} parent=1 // pred_region
      _
    $region41: #{tpu_custom_call.1} parent=1 // pred_fallthru
      _
    // Predicated region
    $region42: #{tpu_custom_call.1} parent=1 // pred_check
      _
    $region43: #{tpu_custom_call.1} parent=1 // pred_check_branch
      %82 = sbr.rel (0) target = $region45
    $region44: #{tpu_custom_call.1} parent=1 // pred_region
      %84 = dma.done [#allocation3], 256
    $region45: #{tpu_custom_call.1} parent=1 // pred_fallthru
      _
    // Predicated region
    $region46: #{tpu_custom_call.1} parent=1 // pred_check
      _
    $region47: #{tpu_custom_call.1} parent=1 // pred_check_branch
      %86 = sbr.rel (0) target = $region49
    $region48: #{tpu_custom_call.1} parent=1 // pred_region
      %88 = dma.done [#allocation6], 256
    $region49: #{tpu_custom_call.1} parent=1 // pred_fallthru
      _
    // Predicated region
    $region50: #{tpu_custom_call.1} parent=1 // pred_check
      _
    $region51: #{tpu_custom_call.1} parent=1 // pred_check_branch
      %90 = sbr.rel (0) target = $region53
    $region52: #{tpu_custom_call.1} parent=1 // pred_region
      %92 = dma.done [#allocation6], 128
    $region53: #{tpu_custom_call.1} parent=1 // pred_fallthru
      _
    // Predicated region
    $region54: #{tpu_custom_call.1} parent=1 // pred_check
      _
    $region55: #{tpu_custom_call.1} parent=1 // pred_check_branch
      %94 = sbr.rel (0) target = $region57
    $region56: #{tpu_custom_call.1} parent=1 // pred_region
      %96 = dma.done [#allocation9], 512
    $region57: #{tpu_custom_call.1} parent=1 // pred_fallthru
      _
    %v97 = vld [vmem:[#allocation2] sm:$0xff]
    %v98 = vld [vmem:[#allocation2 + $0x8] sm:$0xff]
    %v99 = vld [vmem:[#allocation5] sm:$0xff]
    %v100 = vld [vmem:[#allocation5 + $0x8] sm:$0xff]
    %v101 = vadd.f32 %v97, %v99
    %v102 = vadd.f32 %v98, %v100
    %v103 = vld [vmem:[#allocation7] sm:$0x1]
    %v104 = vld [vmem:[#allocation7 + $0x1] sm:$0x1]
    %v105 = vld [vmem:[#allocation7 + $0x2] sm:$0x1]
    %v106 = vld [vmem:[#allocation7 + $0x3] sm:$0x1]
    %v107 = vld [vmem:[#allocation7 + $0x4] sm:$0x1]
    %v108 = vld [vmem:[#allocation7 + $0x5] sm:$0x1]
    %v109 = vld [vmem:[#allocation7 + $0x6] sm:$0x1]
    %v110 = vld [vmem:[%s2] sm:$0xff]
    %v111 = vld [vmem:[%s2 + $0x8] sm:$0xff]
    %v112 = vld [vmem:[%s2 + $0x10] sm:$0xff]
    %v113 = vld [vmem:[%s2 + $0x18] sm:$0xff]
    %v114 = vld [vmem:[%s6] sm:$0x1]
    %v116 = vperm.slane %v114, 0
    %vm118 = vcmask 261120
    %v120 = vsel %vm118, %v101, 0
    %v123 = vsel %vm118, %v102, 0
    %125 = vmatpush.msra.mxu0 0.0
    %126 = vmatpush.msra.mxu0 0.0
    %127 = vmatpush.msra.mxu0 0.0
    %128 = vmatpush.msra.mxu0 0.0
    %129 = vmatpush.msra.mxu0 0.0
    %130 = vmatpush.msra.mxu0 0.0
    %131 = vmatpush.msra.mxu0 0.0
    %132 = vmatpush.msra.mxu0 0.0
    %133 = vmatpush.msra.mxu0 0.0
    %134 = vmatpush.msra.mxu0 0.0
    %135 = vmatpush.msra.mxu0 0.0
    %136 = vmatpush.msra.mxu0 0.0
    %137 = vmatpush.msra.mxu0 %v113
    %138 = vmatpush.msra.mxu0 %v112
    %139 = vmatpush.msra.mxu0 %v111
    %140 = vmatpush.msra.mxu0 %v110
    %141 = vmatmul.f32.gmra.mxu0 %v120
    %v142 = vpop.f32.mrf.mxu0
    %v143 = vadd.f32 %v116, %v142
    %144 = vmatmul.f32.gmra.mxu0 %v123
    %v145 = vpop.f32.mrf.mxu0
    %v146 = vadd.f32 %v116, %v145
    %147 = vdwg.mxu0
    %v148 = vld [vmem:[%s3] sm:$0xff]
    %v149 = vld [vmem:[%s3 + $0x8] sm:$0xff]
    %v150 = vld [vmem:[%s3 + $0x10] sm:$0xff]
    %v151 = vld [vmem:[%s3 + $0x18] sm:$0xff]
    %v152 = vperm.slane %v103, 0
    %v154 = vsel %vm118, %v97, 0
    %v157 = vsel %vm118, %v98, 0
    %159 = vmatpush.msra.mxu0 0.0
    %160 = vmatpush.msra.mxu0 0.0
    %161 = vmatpush.msra.mxu0 0.0
    %162 = vmatpush.msra.mxu0 0.0
    %163 = vmatpush.msra.mxu0 0.0
    %164 = vmatpush.msra.mxu0 0.0
    %165 = vmatpush.msra.mxu0 0.0
    %166 = vmatpush.msra.mxu0 0.0
    %167 = vmatpush.msra.mxu0 0.0
    %168 = vmatpush.msra.mxu0 0.0
    %169 = vmatpush.msra.mxu0 0.0
    %170 = vmatpush.msra.mxu0 0.0
    %171 = vmatpush.msra.mxu0 %v151
    %172 = vmatpush.msra.mxu0 %v150
    %173 = vmatpush.msra.mxu0 %v149
    %174 = vmatpush.msra.mxu0 %v148
    %175 = vmatmul.f32.gmra.mxu0 %v154
    %v176 = vpop.f32.mrf.mxu0
    %v177 = vadd.f32 %v152, %v176
    %178 = vmatmul.f32.gmra.mxu0 %v157
    %v179 = vpop.f32.mrf.mxu0
    %v180 = vadd.f32 %v152, %v179
    %181 = vdwg.mxu0
    %183 = vrot.lane.b32.xlu0 %v143, 96
    %v184 = vpop.permute.xlu0 %183
    %vm185 = vcmask 64512
    %v186 = vsel %vm185, %v143, 0
    %v188 = vsel %vm185, %v184, 0
    %190 = vmatpush.xpose.msra.mxu0 0.0
    %191 = vmatpush.xpose.msra.mxu0 0.0
    %192 = vmatpush.xpose.msra.mxu0 0.0
    %193 = vmatpush.xpose.msra.mxu0 0.0
    %194 = vmatpush.xpose.msra.mxu0 0.0
    %195 = vmatpush.xpose.msra.mxu0 0.0
    %196 = vmatpush.xpose.msra.mxu0 0.0
    %197 = vmatpush.xpose.msra.mxu0 0.0
    %198 = vmatpush.xpose.msra.mxu0 0.0
    %199 = vmatpush.xpose.msra.mxu0 0.0
    %200 = vmatpush.xpose.msra.mxu0 0.0
    %201 = vmatpush.xpose.msra.mxu0 0.0
    %202 = vmatpush.xpose.msra.mxu0 0.0
    %203 = vmatpush.xpose.msra.mxu0 0.0
    %204 = vmatpush.xpose.msra.mxu0 0.0
    %205 = vmatpush.xpose.msra.mxu0 %v188
    %206 = vmatmul.f32.gmra.mxu0 %v186
    %v207 = vpop.f32.mrf.mxu0
    %v208 = vadd.f32 0.0, %v207
    %209 = vdwg.mxu0
    %v210 = vmul.f32 %v208, 0.35355338
    %211 = vrot.lane.b32.xlu0 %v143, 120
    %v212 = vpop.permute.xlu0 %211
    %213 = vrot.lane.b32.xlu0 %v143, 88
    %v214 = vpop.permute.xlu0 %213
    %v215 = vsel %vm185, %v212, 0
    %v217 = vsel %vm185, %v214, 0
    %219 = vmatpush.xpose.msra.mxu0 0.0
    %220 = vmatpush.xpose.msra.mxu0 0.0
    %221 = vmatpush.xpose.msra.mxu0 0.0
    %222 = vmatpush.xpose.msra.mxu0 0.0
    %223 = vmatpush.xpose.msra.mxu0 0.0
    %224 = vmatpush.xpose.msra.mxu0 0.0
    %225 = vmatpush.xpose.msra.mxu0 0.0
    %226 = vmatpush.xpose.msra.mxu0 0.0
    %227 = vmatpush.xpose.msra.mxu0 0.0
    %228 = vmatpush.xpose.msra.mxu0 0.0
    %229 = vmatpush.xpose.msra.mxu0 0.0
    %230 = vmatpush.xpose.msra.mxu0 0.0
    %231 = vmatpush.xpose.msra.mxu0 0.0
    %232 = vmatpush.xpose.msra.mxu0 0.0
    %233 = vmatpush.xpose.msra.mxu0 0.0
    %234 = vmatpush.xpose.msra.mxu0 %v217
    %235 = vmatmul.f32.gmra.mxu0 %v215
    %v236 = vpop.f32.mrf.mxu0
    %v237 = vadd.f32 0.0, %v236
    %238 = vdwg.mxu0
    %v239 = vmul.f32 %v237, 0.35355338
    %240 = vrot.lane.b32.xlu0 %v143, 112
    %v241 = vpop.permute.xlu0 %240
    %242 = vrot.lane.b32.xlu0 %v143, 80
    %v243 = vpop.permute.xlu0 %242
    %v244 = vsel %vm185, %v241, 0
    %v246 = vsel %vm185, %v243, 0
    %248 = vmatpush.xpose.msra.mxu0 0.0
    %249 = vmatpush.xpose.msra.mxu0 0.0
    %250 = vmatpush.xpose.msra.mxu0 0.0
    %251 = vmatpush.xpose.msra.mxu0 0.0
    %252 = vmatpush.xpose.msra.mxu0 0.0
    %253 = vmatpush.xpose.msra.mxu0 0.0
    %254 = vmatpush.xpose.msra.mxu0 0.0
    %255 = vmatpush.xpose.msra.mxu0 0.0
    %256 = vmatpush.xpose.msra.mxu0 0.0
    %257 = vmatpush.xpose.msra.mxu0 0.0
    %258 = vmatpush.xpose.msra.mxu0 0.0
    %259 = vmatpush.xpose.msra.mxu0 0.0
    %260 = vmatpush.xpose.msra.mxu0 0.0
    %261 = vmatpush.xpose.msra.mxu0 0.0
    %262 = vmatpush.xpose.msra.mxu0 0.0
    %263 = vmatpush.xpose.msra.mxu0 %v246
    %264 = vmatmul.f32.gmra.mxu0 %v244
    %v265 = vpop.f32.mrf.mxu0
    %v266 = vadd.f32 0.0, %v265
    %267 = vdwg.mxu0
    %v268 = vmul.f32 %v266, 0.35355338
    %269 = vrot.lane.b32.xlu0 %v143, 104
    %v270 = vpop.permute.xlu0 %269
    %271 = vrot.lane.b32.xlu0 %v143, 72
    %v272 = vpop.permute.xlu0 %271
    %v273 = vsel %vm185, %v270, 0
    %v275 = vsel %vm185, %v272, 0
    %277 = vmatpush.xpose.msra.mxu0 0.0
    %278 = vmatpush.xpose.msra.mxu0 0.0
    %279 = vmatpush.xpose.msra.mxu0 0.0
    %280 = vmatpush.xpose.msra.mxu0 0.0
    %281 = vmatpush.xpose.msra.mxu0 0.0
    %282 = vmatpush.xpose.msra.mxu0 0.0
    %283 = vmatpush.xpose.msra.mxu0 0.0
    %284 = vmatpush.xpose.msra.mxu0 0.0
    %285 = vmatpush.xpose.msra.mxu0 0.0
    %286 = vmatpush.xpose.msra.mxu0 0.0
    %287 = vmatpush.xpose.msra.mxu0 0.0
    %288 = vmatpush.xpose.msra.mxu0 0.0
    %289 = vmatpush.xpose.msra.mxu0 0.0
    %290 = vmatpush.xpose.msra.mxu0 0.0
    %291 = vmatpush.xpose.msra.mxu0 0.0
    %292 = vmatpush.xpose.msra.mxu0 %v275
    %293 = vmatmul.f32.gmra.mxu0 %v273
    %v294 = vpop.f32.mrf.mxu0
    %v295 = vadd.f32 0.0, %v294
    %296 = vdwg.mxu0
    %v297 = vmul.f32 %v295, 0.35355338
    %299 = vrot.lane.b32.xlu0 %v146, 96
    %v300 = vpop.permute.xlu0 %299
    %v301 = vsel %vm185, %v146, 0
    %v303 = vsel %vm185, %v300, 0
    %305 = vmatpush.xpose.msra.mxu0 0.0
    %306 = vmatpush.xpose.msra.mxu0 0.0
    %307 = vmatpush.xpose.msra.mxu0 0.0
    %308 = vmatpush.xpose.msra.mxu0 0.0
    %309 = vmatpush.xpose.msra.mxu0 0.0
    %310 = vmatpush.xpose.msra.mxu0 0.0
    %311 = vmatpush.xpose.msra.mxu0 0.0
    %312 = vmatpush.xpose.msra.mxu0 0.0
    %313 = vmatpush.xpose.msra.mxu0 0.0
    %314 = vmatpush.xpose.msra.mxu0 0.0
    %315 = vmatpush.xpose.msra.mxu0 0.0
    %316 = vmatpush.xpose.msra.mxu0 0.0
    %317 = vmatpush.xpose.msra.mxu0 0.0
    %318 = vmatpush.xpose.msra.mxu0 0.0
    %319 = vmatpush.xpose.msra.mxu0 0.0
    %320 = vmatpush.xpose.msra.mxu0 %v303
    %321 = vmatmul.f32.gmra.mxu0 %v301
    %v322 = vpop.f32.mrf.mxu0
    %v323 = vadd.f32 0.0, %v322
    %324 = vdwg.mxu0
    %v325 = vmul.f32 %v323, 0.35355338
    %326 = vrot.lane.b32.xlu0 %v146, 120
    %v327 = vpop.permute.xlu0 %326
    %328 = vrot.lane.b32.xlu0 %v146, 88
    %v329 = vpop.permute.xlu0 %328
    %v330 = vsel %vm185, %v327, 0
    %v332 = vsel %vm185, %v329, 0
    %334 = vmatpush.xpose.msra.mxu0 0.0
    %335 = vmatpush.xpose.msra.mxu0 0.0
    %336 = vmatpush.xpose.msra.mxu0 0.0
    %337 = vmatpush.xpose.msra.mxu0 0.0
    %338 = vmatpush.xpose.msra.mxu0 0.0
    %339 = vmatpush.xpose.msra.mxu0 0.0
    %340 = vmatpush.xpose.msra.mxu0 0.0
    %341 = vmatpush.xpose.msra.mxu0 0.0
    %342 = vmatpush.xpose.msra.mxu0 0.0
    %343 = vmatpush.xpose.msra.mxu0 0.0
    %344 = vmatpush.xpose.msra.mxu0 0.0
    %345 = vmatpush.xpose.msra.mxu0 0.0
    %346 = vmatpush.xpose.msra.mxu0 0.0
    %347 = vmatpush.xpose.msra.mxu0 0.0
    %348 = vmatpush.xpose.msra.mxu0 0.0
    %349 = vmatpush.xpose.msra.mxu0 %v332
    %350 = vmatmul.f32.gmra.mxu0 %v330
    %v351 = vpop.f32.mrf.mxu0
    %v352 = vadd.f32 0.0, %v351
    %353 = vdwg.mxu0
    %v354 = vmul.f32 %v352, 0.35355338
    %355 = vrot.lane.b32.xlu0 %v146, 112
    %v356 = vpop.permute.xlu0 %355
    %357 = vrot.lane.b32.xlu0 %v146, 80
    %v358 = vpop.permute.xlu0 %357
    %v359 = vsel %vm185, %v356, 0
    %v361 = vsel %vm185, %v358, 0
    %363 = vmatpush.xpose.msra.mxu0 0.0
    %364 = vmatpush.xpose.msra.mxu0 0.0
    %365 = vmatpush.xpose.msra.mxu0 0.0
    %366 = vmatpush.xpose.msra.mxu0 0.0
    %367 = vmatpush.xpose.msra.mxu0 0.0
    %368 = vmatpush.xpose.msra.mxu0 0.0
    %369 = vmatpush.xpose.msra.mxu0 0.0
    %370 = vmatpush.xpose.msra.mxu0 0.0
    %371 = vmatpush.xpose.msra.mxu0 0.0
    %372 = vmatpush.xpose.msra.mxu0 0.0
    %373 = vmatpush.xpose.msra.mxu0 0.0
    %374 = vmatpush.xpose.msra.mxu0 0.0
    %375 = vmatpush.xpose.msra.mxu0 0.0
    %376 = vmatpush.xpose.msra.mxu0 0.0
    %377 = vmatpush.xpose.msra.mxu0 0.0
    %378 = vmatpush.xpose.msra.mxu0 %v361
    %379 = vmatmul.f32.gmra.mxu0 %v359
    %v380 = vpop.f32.mrf.mxu0
    %v381 = vadd.f32 0.0, %v380
    %382 = vdwg.mxu0
    %v383 = vmul.f32 %v381, 0.35355338
    %384 = vrot.lane.b32.xlu0 %v146, 104
    %v385 = vpop.permute.xlu0 %384
    %386 = vrot.lane.b32.xlu0 %v146, 72
    %v387 = vpop.permute.xlu0 %386
    %v388 = vsel %vm185, %v385, 0
    %v390 = vsel %vm185, %v387, 0
    %392 = vmatpush.xpose.msra.mxu0 0.0
    %393 = vmatpush.xpose.msra.mxu0 0.0
    %394 = vmatpush.xpose.msra.mxu0 0.0
    %395 = vmatpush.xpose.msra.mxu0 0.0
    %396 = vmatpush.xpose.msra.mxu0 0.0
    %397 = vmatpush.xpose.msra.mxu0 0.0
    %398 = vmatpush.xpose.msra.mxu0 0.0
    %399 = vmatpush.xpose.msra.mxu0 0.0
    %400 = vmatpush.xpose.msra.mxu0 0.0
    %401 = vmatpush.xpose.msra.mxu0 0.0
    %402 = vmatpush.xpose.msra.mxu0 0.0
    %403 = vmatpush.xpose.msra.mxu0 0.0
    %404 = vmatpush.xpose.msra.mxu0 0.0
    %405 = vmatpush.xpose.msra.mxu0 0.0
    %406 = vmatpush.xpose.msra.mxu0 0.0
    %407 = vmatpush.xpose.msra.mxu0 %v390
    %408 = vmatmul.f32.gmra.mxu0 %v388
    %v409 = vpop.f32.mrf.mxu0
    %v410 = vadd.f32 0.0, %v409
    %411 = vdwg.mxu0
    %v412 = vmul.f32 %v410, 0.35355338
    %v413 = vsel %vm185, %v210, -inf
    %414 = vmax.xlane.f32.xlu0 %v413
    %v415 = vpop.xlane.xlu0 %414
    %v416 = vsel %vm185, %v239, -inf
    %417 = vmax.xlane.f32.xlu0 %v416
    %v418 = vpop.xlane.xlu0 %417
    %v419 = vsel %vm185, %v268, -inf
    %420 = vmax.xlane.f32.xlu0 %v419
    %v421 = vpop.xlane.xlu0 %420
    %v422 = vsel %vm185, %v297, -inf
    %423 = vmax.xlane.f32.xlu0 %v422
    %v424 = vpop.xlane.xlu0 %423
    %v425 = vsel %vm185, %v325, -inf
    %426 = vmax.xlane.f32.xlu0 %v425
    %v427 = vpop.xlane.xlu0 %426
    %v428 = vsel %vm185, %v354, -inf
    %429 = vmax.xlane.f32.xlu0 %v428
    %v430 = vpop.xlane.xlu0 %429
    %v431 = vsel %vm185, %v383, -inf
    %432 = vmax.xlane.f32.xlu0 %v431
    %v433 = vpop.xlane.xlu0 %432
    %v434 = vsel %vm185, %v412, -inf
    %435 = vmax.xlane.f32.xlu0 %v434
    %v436 = vpop.xlane.xlu0 %435
    %v437 = vsub.f32 %v210, %v415
    %v438 = vsub.f32 %v239, %v418
    %v439 = vsub.f32 %v268, %v421
    %v440 = vsub.f32 %v297, %v424
    %v441 = vsub.f32 %v325, %v427
    %v442 = vsub.f32 %v354, %v430
    %v443 = vsub.f32 %v383, %v433
    %v444 = vsub.f32 %v412, %v436
    %v445 = vmul.f32 %v437, 1.442695
    %v446 = vpow.pop %v445
    %v447 = vmul.f32 %v438, 1.442695
    %v448 = vpow.pop %v447
    %v449 = vmul.f32 %v439, 1.442695
    %v450 = vpow.pop %v449
    %v451 = vmul.f32 %v440, 1.442695
    %v452 = vpow.pop %v451
    %v453 = vmul.f32 %v441, 1.442695
    %v454 = vpow.pop %v453
    %v455 = vmul.f32 %v442, 1.442695
    %v456 = vpow.pop %v455
    %v457 = vmul.f32 %v443, 1.442695
    %v458 = vpow.pop %v457
    %v459 = vmul.f32 %v444, 1.442695
    %v460 = vpow.pop %v459
    %v461 = vsel %vm185, %v446, 0.0
    %462 = vadd.xlane.f32.xlu0 %v461
    %v463 = vpop.xlane.xlu0 %462
    %v464 = vsel %vm185, %v448, 0.0
    %465 = vadd.xlane.f32.xlu0 %v464
    %v466 = vpop.xlane.xlu0 %465
    %v467 = vsel %vm185, %v450, 0.0
    %468 = vadd.xlane.f32.xlu0 %v467
    %v469 = vpop.xlane.xlu0 %468
    %v470 = vsel %vm185, %v452, 0.0
    %471 = vadd.xlane.f32.xlu0 %v470
    %v472 = vpop.xlane.xlu0 %471
    %v473 = vsel %vm185, %v454, 0.0
    %474 = vadd.xlane.f32.xlu0 %v473
    %v475 = vpop.xlane.xlu0 %474
    %v476 = vsel %vm185, %v456, 0.0
    %477 = vadd.xlane.f32.xlu0 %v476
    %v478 = vpop.xlane.xlu0 %477
    %v479 = vsel %vm185, %v458, 0.0
    %480 = vadd.xlane.f32.xlu0 %v479
    %v481 = vpop.xlane.xlu0 %480
    %v482 = vsel %vm185, %v460, 0.0
    %483 = vadd.xlane.f32.xlu0 %v482
    %v484 = vpop.xlane.xlu0 %483
    %v485 = vrcp.pop %v463
    %v486 = vrcp.pop %v466
    %v487 = vrcp.pop %v469
    %v488 = vrcp.pop %v472
    %v489 = vrcp.pop %v475
    %v490 = vrcp.pop %v478
    %v491 = vrcp.pop %v481
    %v492 = vrcp.pop %v484
    %v493 = vmul.f32 %v463, %v485
    %v494 = vmul.f32 %v466, %v486
    %v495 = vmul.f32 %v469, %v487
    %v496 = vmul.f32 %v472, %v488
    %v497 = vmul.f32 %v475, %v489
    %v498 = vmul.f32 %v478, %v490
    %v499 = vmul.f32 %v481, %v491
    %v500 = vmul.f32 %v484, %v492
    %v501 = vsub.f32 2.0, %v493
    %v502 = vsub.f32 2.0, %v494
    %v503 = vsub.f32 2.0, %v495
    %v504 = vsub.f32 2.0, %v496
    %v505 = vsub.f32 2.0, %v497
    %v506 = vsub.f32 2.0, %v498
    %v507 = vsub.f32 2.0, %v499
    %v508 = vsub.f32 2.0, %v500
    %v509 = vmul.f32 %v485, %v501
    %v510 = vmul.f32 %v486, %v502
    %v511 = vmul.f32 %v487, %v503
    %v512 = vmul.f32 %v488, %v504
    %v513 = vmul.f32 %v489, %v505
    %v514 = vmul.f32 %v490, %v506
    %v515 = vmul.f32 %v491, %v507
    %v516 = vmul.f32 %v492, %v508
    %v517 = vmul.f32 %v446, %v509
    %v518 = vmul.f32 %v448, %v510
    %v519 = vmul.f32 %v450, %v511
    %v520 = vmul.f32 %v452, %v512
    %v521 = vmul.f32 %v454, %v513
    %v522 = vmul.f32 %v456, %v514
    %v523 = vmul.f32 %v458, %v515
    %v524 = vmul.f32 %v460, %v516
    %v526 = vsel %vm185, %v517, 0
    %528 = vmatpush.msra.mxu0 0.0
    %529 = vmatpush.msra.mxu0 0.0
    %530 = vmatpush.msra.mxu0 0.0
    %531 = vmatpush.msra.mxu0 0.0
    %532 = vmatpush.msra.mxu0 0.0
    %533 = vmatpush.msra.mxu0 0.0
    %534 = vmatpush.msra.mxu0 0.0
    %535 = vmatpush.msra.mxu0 0.0
    %536 = vmatpush.msra.mxu0 0.0
    %537 = vmatpush.msra.mxu0 0.0
    %538 = vmatpush.msra.mxu0 0.0
    %539 = vmatpush.msra.mxu0 0.0
    %540 = vmatpush.msra.mxu0 0.0
    %541 = vmatpush.msra.mxu0 0.0
    %542 = vmatpush.msra.mxu0 0.0
    %543 = vmatpush.msra.mxu0 %v177
    %544 = vmatmul.f32.gmra.mxu0 %v526
    %v545 = vpop.f32.mrf.mxu0
    %v546 = vadd.f32 0.0, %v545
    %547 = vdwg.mxu0
    %549 = vrot.lane.b32.xlu0 %v177, 120
    %v550 = vpop.permute.xlu0 %549
    %v553 = vsel %vm185, %v518, 0
    %555 = vmatpush.msra.mxu0 0.0
    %556 = vmatpush.msra.mxu0 0.0
    %557 = vmatpush.msra.mxu0 0.0
    %558 = vmatpush.msra.mxu0 0.0
    %559 = vmatpush.msra.mxu0 0.0
    %560 = vmatpush.msra.mxu0 0.0
    %561 = vmatpush.msra.mxu0 0.0
    %562 = vmatpush.msra.mxu0 0.0
    %563 = vmatpush.msra.mxu0 0.0
    %564 = vmatpush.msra.mxu0 0.0
    %565 = vmatpush.msra.mxu0 0.0
    %566 = vmatpush.msra.mxu0 0.0
    %567 = vmatpush.msra.mxu0 0.0
    %568 = vmatpush.msra.mxu0 0.0
    %569 = vmatpush.msra.mxu0 0.0
    %570 = vmatpush.msra.mxu0 %v550
    %571 = vmatmul.f32.gmra.mxu0 %v553
    %v572 = vpop.f32.mrf.mxu0
    %v573 = vadd.f32 0.0, %v572
    %574 = vdwg.mxu0
    %575 = vrot.lane.b32.xlu0 %v177, 112
    %v576 = vpop.permute.xlu0 %575
    %v579 = vsel %vm185, %v519, 0
    %581 = vmatpush.msra.mxu0 0.0
    %582 = vmatpush.msra.mxu0 0.0
    %583 = vmatpush.msra.mxu0 0.0
    %584 = vmatpush.msra.mxu0 0.0
    %585 = vmatpush.msra.mxu0 0.0
    %586 = vmatpush.msra.mxu0 0.0
    %587 = vmatpush.msra.mxu0 0.0
    %588 = vmatpush.msra.mxu0 0.0
    %589 = vmatpush.msra.mxu0 0.0
    %590 = vmatpush.msra.mxu0 0.0
    %591 = vmatpush.msra.mxu0 0.0
    %592 = vmatpush.msra.mxu0 0.0
    %593 = vmatpush.msra.mxu0 0.0
    %594 = vmatpush.msra.mxu0 0.0
    %595 = vmatpush.msra.mxu0 0.0
    %596 = vmatpush.msra.mxu0 %v576
    %597 = vmatmul.f32.gmra.mxu0 %v579
    %v598 = vpop.f32.mrf.mxu0
    %v599 = vadd.f32 0.0, %v598
    %600 = vdwg.mxu0
    %601 = vrot.lane.b32.xlu0 %v177, 104
    %v602 = vpop.permute.xlu0 %601
    %v605 = vsel %vm185, %v520, 0
    %607 = vmatpush.msra.mxu0 0.0
    %608 = vmatpush.msra.mxu0 0.0
    %609 = vmatpush.msra.mxu0 0.0
    %610 = vmatpush.msra.mxu0 0.0
    %611 = vmatpush.msra.mxu0 0.0
    %612 = vmatpush.msra.mxu0 0.0
    %613 = vmatpush.msra.mxu0 0.0
    %614 = vmatpush.msra.mxu0 0.0
    %615 = vmatpush.msra.mxu0 0.0
    %616 = vmatpush.msra.mxu0 0.0
    %617 = vmatpush.msra.mxu0 0.0
    %618 = vmatpush.msra.mxu0 0.0
    %619 = vmatpush.msra.mxu0 0.0
    %620 = vmatpush.msra.mxu0 0.0
    %621 = vmatpush.msra.mxu0 0.0
    %622 = vmatpush.msra.mxu0 %v602
    %623 = vmatmul.f32.gmra.mxu0 %v605
    %v624 = vpop.f32.mrf.mxu0
    %v625 = vadd.f32 0.0, %v624
    %626 = vdwg.mxu0
    %628 = vrot.lane.b32.xlu0 %v573, 8
    %v629 = vpop.permute.xlu0 %628
    %632 = vrot.lane.b32.xlu0 %v599, 16
    %v633 = vpop.permute.xlu0 %632
    %636 = vrot.lane.b32.xlu0 %v625, 24
    %v637 = vpop.permute.xlu0 %636
    %v639 = vsel %vm185, %v546, %v629
    %vm640 = vcmask 130048
    %v641 = vsel %vm640, %v639, %v633
    %vm642 = vcmask 195584
    %v643 = vsel %vm642, %v641, %v637
    %v645 = vsel %vm185, %v521, 0
    %647 = vmatpush.msra.mxu0 0.0
    %648 = vmatpush.msra.mxu0 0.0
    %649 = vmatpush.msra.mxu0 0.0
    %650 = vmatpush.msra.mxu0 0.0
    %651 = vmatpush.msra.mxu0 0.0
    %652 = vmatpush.msra.mxu0 0.0
    %653 = vmatpush.msra.mxu0 0.0
    %654 = vmatpush.msra.mxu0 0.0
    %655 = vmatpush.msra.mxu0 0.0
    %656 = vmatpush.msra.mxu0 0.0
    %657 = vmatpush.msra.mxu0 0.0
    %658 = vmatpush.msra.mxu0 0.0
    %659 = vmatpush.msra.mxu0 0.0
    %660 = vmatpush.msra.mxu0 0.0
    %661 = vmatpush.msra.mxu0 0.0
    %662 = vmatpush.msra.mxu0 %v180
    %663 = vmatmul.f32.gmra.mxu0 %v645
    %v664 = vpop.f32.mrf.mxu0
    %v665 = vadd.f32 0.0, %v664
    %666 = vdwg.mxu0
    %668 = vrot.lane.b32.xlu0 %v180, 120
    %v669 = vpop.permute.xlu0 %668
    %v672 = vsel %vm185, %v522, 0
    %674 = vmatpush.msra.mxu0 0.0
    %675 = vmatpush.msra.mxu0 0.0
    %676 = vmatpush.msra.mxu0 0.0
    %677 = vmatpush.msra.mxu0 0.0
    %678 = vmatpush.msra.mxu0 0.0
    %679 = vmatpush.msra.mxu0 0.0
    %680 = vmatpush.msra.mxu0 0.0
    %681 = vmatpush.msra.mxu0 0.0
    %682 = vmatpush.msra.mxu0 0.0
    %683 = vmatpush.msra.mxu0 0.0
    %684 = vmatpush.msra.mxu0 0.0
    %685 = vmatpush.msra.mxu0 0.0
    %686 = vmatpush.msra.mxu0 0.0
    %687 = vmatpush.msra.mxu0 0.0
    %688 = vmatpush.msra.mxu0 0.0
    %689 = vmatpush.msra.mxu0 %v669
    %690 = vmatmul.f32.gmra.mxu0 %v672
    %v691 = vpop.f32.mrf.mxu0
    %v692 = vadd.f32 0.0, %v691
    %693 = vdwg.mxu0
    %694 = vrot.lane.b32.xlu0 %v180, 112
    %v695 = vpop.permute.xlu0 %694
    %v698 = vsel %vm185, %v523, 0
    %700 = vmatpush.msra.mxu0 0.0
    %701 = vmatpush.msra.mxu0 0.0
    %702 = vmatpush.msra.mxu0 0.0
    %703 = vmatpush.msra.mxu0 0.0
    %704 = vmatpush.msra.mxu0 0.0
    %705 = vmatpush.msra.mxu0 0.0
    %706 = vmatpush.msra.mxu0 0.0
    %707 = vmatpush.msra.mxu0 0.0
    %708 = vmatpush.msra.mxu0 0.0
    %709 = vmatpush.msra.mxu0 0.0
    %710 = vmatpush.msra.mxu0 0.0
    %711 = vmatpush.msra.mxu0 0.0
    %712 = vmatpush.msra.mxu0 0.0
    %713 = vmatpush.msra.mxu0 0.0
    %714 = vmatpush.msra.mxu0 0.0
    %715 = vmatpush.msra.mxu0 %v695
    %716 = vmatmul.f32.gmra.mxu0 %v698
    %v717 = vpop.f32.mrf.mxu0
    %v718 = vadd.f32 0.0, %v717
    %719 = vdwg.mxu0
    %720 = vrot.lane.b32.xlu0 %v180, 104
    %v721 = vpop.permute.xlu0 %720
    %v724 = vsel %vm185, %v524, 0
    %726 = vmatpush.msra.mxu0 0.0
    %727 = vmatpush.msra.mxu0 0.0
    %728 = vmatpush.msra.mxu0 0.0
    %729 = vmatpush.msra.mxu0 0.0
    %730 = vmatpush.msra.mxu0 0.0
    %731 = vmatpush.msra.mxu0 0.0
    %732 = vmatpush.msra.mxu0 0.0
    %733 = vmatpush.msra.mxu0 0.0
    %734 = vmatpush.msra.mxu0 0.0
    %735 = vmatpush.msra.mxu0 0.0
    %736 = vmatpush.msra.mxu0 0.0
    %737 = vmatpush.msra.mxu0 0.0
    %738 = vmatpush.msra.mxu0 0.0
    %739 = vmatpush.msra.mxu0 0.0
    %740 = vmatpush.msra.mxu0 0.0
    %741 = vmatpush.msra.mxu0 %v721
    %742 = vmatmul.f32.gmra.mxu0 %v724
    %v743 = vpop.f32.mrf.mxu0
    %v744 = vadd.f32 0.0, %v743
    %745 = vdwg.mxu0
    %747 = vrot.lane.b32.xlu0 %v692, 8
    %v748 = vpop.permute.xlu0 %747
    %751 = vrot.lane.b32.xlu0 %v718, 16
    %v752 = vpop.permute.xlu0 %751
    %755 = vrot.lane.b32.xlu0 %v744, 24
    %v756 = vpop.permute.xlu0 %755
    %v758 = vsel %vm185, %v665, %v748
    %v759 = vsel %vm640, %v758, %v752
    %v760 = vsel %vm642, %v759, %v756
    %v761 = vld [vmem:[%s4] sm:$0xff]
    %v762 = vld [vmem:[%s4 + $0x8] sm:$0xff]
    %v763 = vld [vmem:[%s4 + $0x10] sm:$0xff]
    %v764 = vld [vmem:[%s4 + $0x18] sm:$0xff]
    %v765 = vperm.slane %v104, 0
    %v767 = vsel %vm118, %v643, 0
    %v770 = vsel %vm118, %v760, 0
    %772 = vmatpush.msra.mxu0 0.0
    %773 = vmatpush.msra.mxu0 0.0
    %774 = vmatpush.msra.mxu0 0.0
    %775 = vmatpush.msra.mxu0 0.0
    %776 = vmatpush.msra.mxu0 0.0
    %777 = vmatpush.msra.mxu0 0.0
    %778 = vmatpush.msra.mxu0 0.0
    %779 = vmatpush.msra.mxu0 0.0
    %780 = vmatpush.msra.mxu0 0.0
    %781 = vmatpush.msra.mxu0 0.0
    %782 = vmatpush.msra.mxu0 0.0
    %783 = vmatpush.msra.mxu0 0.0
    %784 = vmatpush.msra.mxu0 %v764
    %785 = vmatpush.msra.mxu0 %v763
    %786 = vmatpush.msra.mxu0 %v762
    %787 = vmatpush.msra.mxu0 %v761
    %788 = vmatmul.f32.gmra.mxu0 %v767
    %v789 = vpop.f32.mrf.mxu0
    %v790 = vadd.f32 %v765, %v789
    %791 = vmatmul.f32.gmra.mxu0 %v770
    %v792 = vpop.f32.mrf.mxu0
    %v793 = vadd.f32 %v765, %v792
    %794 = vdwg.mxu0
    %v795 = vadd.f32 %v97, %v790
    %v796 = vadd.f32 %v98, %v793
    %v797 = vsel %vm118, %v795, 0.0
    %798 = vadd.xlane.f32.xlu0 %v797
    %v799 = vpop.xlane.xlu0 %798
    %v800 = vsel %vm118, %v796, 0.0
    %801 = vadd.xlane.f32.xlu0 %v800
    %v802 = vpop.xlane.xlu0 %801
    %v803 = vrcp.pop 32.0
    %v804 = vmul.f32 32.0, %v803
    %v805 = vsub.f32 1.0, %v804
    %v806 = vmul.f32 %v803, %v805
    %v807 = vadd.f32 %v803, %v806
    %vm808 = vweird.f32 %v803
    %v809 = vsel %vm808, %v803, %v807
    %v810 = vmul.f32 %v799, %v809
    %v811 = vmul.f32 %v802, %v809
    %v812 = vsub.f32 %v795, %v810
    %v813 = vsub.f32 %v796, %v811
    %v814 = vmul.f32 %v812, %v812
    %v815 = vmul.f32 %v813, %v813
    %v816 = vsel %vm118, %v814, 0.0
    %817 = vadd.xlane.f32.xlu0 %v816
    %v818 = vpop.xlane.xlu0 %817
    %v819 = vsel %vm118, %v815, 0.0
    %820 = vadd.xlane.f32.xlu0 %v819
    %v821 = vpop.xlane.xlu0 %820
    %v822 = vmul.f32 %v818, %v809
    %v823 = vmul.f32 %v821, %v809
    %v824 = vadd.f32 %v822, 1e-05
    %v825 = vadd.f32 %v823, 1e-05
    %v826 = vrsqrt.pop %v824
    %v827 = vmul.f32 %v826, %v824
    %v828 = vmul.f32 %v827, %v826
    %v829 = vmul.f32 0.5, %v828
    %v830 = vsub.f32 1.5, %v829
    %v831 = vmul.f32 %v826, %v830
    %vm832 = vweird.f32 %v824
    %vm833 = vweird.f32 %v826
    %vm834 = vmor %vm832, %vm833
    %v835 = vsel %vm834, %v826, %v831
    %v836 = vrsqrt.pop %v825
    %v837 = vmul.f32 %v836, %v825
    %v838 = vmul.f32 %v837, %v836
    %v839 = vmul.f32 0.5, %v838
    %v840 = vsub.f32 1.5, %v839
    %v841 = vmul.f32 %v836, %v840
    %vm842 = vweird.f32 %v825
    %vm843 = vweird.f32 %v836
    %vm844 = vmor %vm842, %vm843
    %v845 = vsel %vm844, %v836, %v841
    %v846 = vmul.f32 %v812, %v835
    %v847 = vmul.f32 %v813, %v845
    %v848 = vperm.slane %v105, 0
    %v849 = vmul.f32 %v846, %v848
    %v850 = vmul.f32 %v847, %v848
    %v851 = vperm.slane %v106, 0
    %v852 = vadd.f32 %v849, %v851
    %v853 = vadd.f32 %v850, %v851
    %v854 = vld [vmem:[#allocation8] sm:$0xff]
    %v855 = vld [vmem:[#allocation8 + $0x8] sm:$0xff]
    %v856 = vld [vmem:[#allocation8 + $0x10] sm:$0xff]
    %v857 = vld [vmem:[#allocation8 + $0x18] sm:$0xff]
    %v858 = vld [vmem:[%s8] sm:$0x1]
    %v860 = vperm.slane %v858, 0
    %v863 = vsel %vm118, %v852, 0
    %v866 = vsel %vm118, %v853, 0
    %868 = vmatpush.msra.mxu0 0.0
    %869 = vmatpush.msra.mxu0 0.0
    %870 = vmatpush.msra.mxu0 0.0
    %871 = vmatpush.msra.mxu0 0.0
    %872 = vmatpush.msra.mxu0 0.0
    %873 = vmatpush.msra.mxu0 0.0
    %874 = vmatpush.msra.mxu0 0.0
    %875 = vmatpush.msra.mxu0 0.0
    %876 = vmatpush.msra.mxu0 0.0
    %877 = vmatpush.msra.mxu0 0.0
    %878 = vmatpush.msra.mxu0 0.0
    %879 = vmatpush.msra.mxu0 0.0
    %880 = vmatpush.msra.mxu0 %v857
    %881 = vmatpush.msra.mxu0 %v856
    %882 = vmatpush.msra.mxu0 %v855
    %883 = vmatpush.msra.mxu0 %v854
    %884 = vmatmul.f32.gmra.mxu0 %v863
    %v885 = vpop.f32.mrf.mxu0
    %v886 = vadd.f32 %v860, %v885
    %887 = vmatmul.f32.gmra.mxu0 %v866
    %v888 = vpop.f32.mrf.mxu0
    %v889 = vadd.f32 %v860, %v888
    %890 = vdwg.mxu0
    %v891 = vmax.f32 %v886, 0.0
    %v892 = vmax.f32 %v889, 0.0
    %v893 = vld [vmem:[%s9] sm:$0xff]
    %v894 = vld [vmem:[%s9 + $0x8] sm:$0xff]
    %v895 = vld [vmem:[%s9 + $0x10] sm:$0xff]
    %v896 = vld [vmem:[%s9 + $0x18] sm:$0xff]
    %v897 = vld [vmem:[%s9 + $0x20] sm:$0xff]
    %v898 = vld [vmem:[%s9 + $0x28] sm:$0xff]
    %v899 = vld [vmem:[%s9 + $0x30] sm:$0xff]
    %v900 = vld [vmem:[%s9 + $0x38] sm:$0xff]
    %v901 = vperm.slane %v109, 0
    %vm902 = vcmask 523264
    %v904 = vsel %vm902, %v891, 0
    %v907 = vsel %vm902, %v892, 0
    %909 = vmatpush.msra.mxu0 0.0
    %910 = vmatpush.msra.mxu0 0.0
    %911 = vmatpush.msra.mxu0 0.0
    %912 = vmatpush.msra.mxu0 0.0
    %913 = vmatpush.msra.mxu0 0.0
    %914 = vmatpush.msra.mxu0 0.0
    %915 = vmatpush.msra.mxu0 0.0
    %916 = vmatpush.msra.mxu0 0.0
    %917 = vmatpush.msra.mxu0 %v900
    %918 = vmatpush.msra.mxu0 %v899
    %919 = vmatpush.msra.mxu0 %v898
    %920 = vmatpush.msra.mxu0 %v897
    %921 = vmatpush.msra.mxu0 %v896
    %922 = vmatpush.msra.mxu0 %v895
    %923 = vmatpush.msra.mxu0 %v894
    %924 = vmatpush.msra.mxu0 %v893
    %925 = vmatmul.f32.gmra.mxu0 %v904
    %v926 = vpop.f32.mrf.mxu0
    %v927 = vadd.f32 %v901, %v926
    %928 = vmatmul.f32.gmra.mxu0 %v907
    %v929 = vpop.f32.mrf.mxu0
    %v930 = vadd.f32 %v901, %v929
    %931 = vdwg.mxu0
    %v932 = vadd.f32 %v852, %v927
    %v933 = vadd.f32 %v853, %v930
    %v934 = vsel %vm118, %v932, 0.0
    %935 = vadd.xlane.f32.xlu0 %v934
    %v936 = vpop.xlane.xlu0 %935
    %v937 = vsel %vm118, %v933, 0.0
    %938 = vadd.xlane.f32.xlu0 %v937
    %v939 = vpop.xlane.xlu0 %938
    %v940 = vmul.f32 %v936, %v809
    %v941 = vmul.f32 %v939, %v809
    %v942 = vsub.f32 %v932, %v940
    %v943 = vsub.f32 %v933, %v941
    %v944 = vmul.f32 %v942, %v942
    %v945 = vmul.f32 %v943, %v943
    %v946 = vsel %vm118, %v944, 0.0
    %947 = vadd.xlane.f32.xlu0 %v946
    %v948 = vpop.xlane.xlu0 %947
    %v949 = vsel %vm118, %v945, 0.0
    %950 = vadd.xlane.f32.xlu0 %v949
    %v951 = vpop.xlane.xlu0 %950
    %v952 = vmul.f32 %v948, %v809
    %v953 = vmul.f32 %v951, %v809
    %v954 = vadd.f32 %v952, 1e-05
    %v955 = vadd.f32 %v953, 1e-05
    %v956 = vrsqrt.pop %v954
    %v957 = vmul.f32 %v956, %v954
    %v958 = vmul.f32 %v957, %v956
    %v959 = vmul.f32 0.5, %v958
    %v960 = vsub.f32 1.5, %v959
    %v961 = vmul.f32 %v956, %v960
    %vm962 = vweird.f32 %v954
    %vm963 = vweird.f32 %v956
    %vm964 = vmor %vm962, %vm963
    %v965 = vsel %vm964, %v956, %v961
    %v966 = vrsqrt.pop %v955
    %v967 = vmul.f32 %v966, %v955
    %v968 = vmul.f32 %v967, %v966
    %v969 = vmul.f32 0.5, %v968
    %v970 = vsub.f32 1.5, %v969
    %v971 = vmul.f32 %v966, %v970
    %vm972 = vweird.f32 %v955
    %vm973 = vweird.f32 %v966
    %vm974 = vmor %vm972, %vm973
    %v975 = vsel %vm974, %v966, %v971
    %v976 = vmul.f32 %v942, %v965
    %v977 = vmul.f32 %v943, %v975
    %v978 = vperm.slane %v107, 0
    %v979 = vmul.f32 %v976, %v978
    %v980 = vmul.f32 %v977, %v978
    %v981 = vperm.slane %v108, 0
    %v982 = vadd.f32 %v979, %v981
    %v983 = vadd.f32 %v980, %v981
    %984 = vst.msk [vmem:[#allocation10] sm:$0xff] %vm118, %v982
    %985 = vst.msk [vmem:[#allocation10 + $0x8] sm:$0xff] %vm118, %v983
    // Predicated region
    $region58: #{tpu_custom_call.1} parent=1 // pred_check
      _
    $region59: #{tpu_custom_call.1} parent=1 // pred_check_branch
      %987 = sbr.rel (0) target = $region61
    $region60: #{tpu_custom_call.1} parent=1 // pred_region
      %989 = vsyncadd [#allocation4], 0
      %s990 = sshll.u32 [#allocation10], 4
      %s991 = int_to_ptr.vmem [resolvable:$true] %s990
      %s992 = sshll.u32 %s10, 4
      %s993 = int_to_ptr.hbm [resolvable:$true] %s992
      %998 = dma.vmem_to_hbm [thread:$0]  %s991, 256, %s993, [#allocation4], 128, 128, 8
    $region61: #{tpu_custom_call.1} parent=1 // pred_fallthru
      _
    // Predicated region
    $region62: #{tpu_custom_call.1} parent=1 // pred_check
      _
    $region63: #{tpu_custom_call.1} parent=1 // pred_check_branch
      %1000 = sbr.rel (0) target = $region65
    $region64: #{tpu_custom_call.1} parent=1 // pred_region
      %1002 = dma.done [#allocation4], 256
    $region65: #{tpu_custom_call.1} parent=1 // pred_fallthru
      _
    %1003 = vsyncpa [#allocation3], 1
    %1004 = vsyncpa [#allocation6], 1
    %1005 = vsyncpa [#allocation9], 1
    %1006 = vsyncpa [#allocation4], 1

</llo_original>
